<compile_context>
chip_gen: v5e
topology: v5e:2x2
jax: 0.10.0
libtpu: 0.0.40
codegen_flags: <defaults>
</compile_context>

<pallas_src>
import functools

import jax
import jax.numpy as jnp
from jax import lax
from jax.experimental import pallas as pl
from jax.experimental.pallas import tpu as pltpu


def _round_up(x, m):
    return ((x + m - 1) // m) * m


# --------------------------------------------------------------------------
# Kernel 1: 3-NN inverse-distance interpolation, row-tiled over N
# --------------------------------------------------------------------------
def _interp_kernel(xyz1_ref, xyz2t_ref, pts2_ref, out_ref, *, n_valid):
    x1 = xyz1_ref[0]            # (TN, 3)   query points (rows on sublanes), f32
    x2t = xyz2t_ref[0]          # (3, S)    source points, coords on sublanes, f32
    TN = x1.shape[0]
    S = x2t.shape[1]

    # Squared distances via 3 lane-dense VPU broadcast-FMA passes (no MXU).
    d = jnp.zeros((TN, S), dtype=jnp.float32)
    for c in range(3):
        diff = x1[:, c:c + 1] - x2t[c:c + 1, :]      # (TN,1)-(1,S) -> (TN,S)
        d = d + diff * diff                          # d >= 0 always

    # Packed sortable key: d bits (monotone for d >= 0) in the high bits,
    # column index in the low idx_bits.  One jnp.min per top-k step gives both
    # the (quantized) min distance and its argmin.
    idx_bits = max(1, (S - 1).bit_length())
    mask_val = (1 << idx_bits) - 1
    idx_mask = jnp.int32(mask_val)
    inv_mask = jnp.int32(~mask_val)
    kmax = jnp.int32(0x7FFFFFFF)

    iota_s = lax.broadcasted_iota(jnp.int32, (TN, S), 1)
    key = (pltpu.bitcast(d, jnp.int32) & inv_mask) | iota_s

    w = jnp.zeros((TN, S), dtype=jnp.float32)
    wsum = jnp.zeros((TN, 1), dtype=jnp.float32)      # normalizer accumulated
    for _ in range(min(3, S)):                        # in-loop (saves one XLU
        kmin = jnp.min(key, axis=-1, keepdims=True)   # (TN,1)   reduction)
        sel = kmin & idx_mask                                   # argmin column
        dmin = pltpu.bitcast(kmin & inv_mask, jnp.float32)      # min distance
        recip = pl.reciprocal(dmin + 1e-8, approx=True)         # EUP slot
        onehot = iota_s == sel                                  # (TN, S)
        w = w + jnp.where(onehot, recip, 0.0)
        wsum = wsum + recip
        key = jnp.where(onehot, kmax, key)                      # mask winner
    w = w * pl.reciprocal(wsum, approx=True)

    # Weighted gather as a dense bf16 MXU matmul with f32 accumulation.
    out = jnp.dot(w.astype(jnp.bfloat16), pts2_ref[0],
                  preferred_element_type=jnp.float32)           # (TN, D2p)

    if n_valid is not None:
        # Zero padded query rows so downstream BN statistics stay clean.
        row0 = pl.program_id(1) * TN
        rid = row0 + lax.broadcasted_iota(jnp.int32, (TN, 1), 0)
        out = out * (rid < n_valid).astype(jnp.float32)

    out_ref[0] = out.astype(jnp.bfloat16)


def interpolate_points(xyz1_pad, xyz2_bcs, pts2_p, *, n_valid, tile_rows):
    """xyz1_pad: [B,Npad,3] f32   xyz2_bcs: [B,3,S] f32   pts2_p: [B,S,D2p] bf16
    returns [B,Npad,D2p] bf16 (padded rows zeroed)."""
    B, Npad, _ = xyz1_pad.shape
    S = xyz2_bcs.shape[-1]
    D2p = pts2_p.shape[-1]
    n_tiles = Npad // tile_rows

    # VMEM sizing (v7x scoped default is 32 MiB; resident pts2 block is the
    # big item).  TODO(synk): single-buffer the per-batch resident blocks with
    # pipeline_mode=pl.Buffered(1) to further cut residency on v7x.
    need = 2 * (tile_rows * 3 * 4 + 3 * S * 4 + S * D2p * 2
                + tile_rows * D2p * 2) + 10 * tile_rows * S * 4
    vmem_limit = int(min(128 * 1024 * 1024,
                         max(32 * 1024 * 1024, int(need * 1.5))))

    kern = functools.partial(_interp_kernel, n_valid=n_valid)
    return pl.pallas_call(
        kern,
        out_shape=jax.ShapeDtypeStruct((B, Npad, D2p), jnp.bfloat16),
        grid=(B, n_tiles),
        in_specs=[
            pl.BlockSpec((1, tile_rows, 3), lambda b, n: (b, n, 0)),
            pl.BlockSpec((1, 3, S), lambda b, n: (b, 0, 0)),    # resident per b
            pl.BlockSpec((1, S, D2p), lambda b, n: (b, 0, 0)),  # resident per b
        ],
        out_specs=pl.BlockSpec((1, tile_rows, D2p), lambda b, n: (b, n, 0)),
        compiler_params=pltpu.CompilerParams(
            dimension_semantics=("parallel", "parallel"),
            vmem_limit_bytes=vmem_limit),
        cost_estimate=pl.CostEstimate(
            flops=int(B * Npad * S * (2 * D2p + 18)),
            transcendentals=int(4 * B * Npad),
            bytes_accessed=int(4 * B * Npad * 3 + 4 * B * 3 * S
                               + 2 * B * S * D2p + 2 * B * Npad * D2p)),
    )(xyz1_pad, xyz2_bcs, pts2_p)


# --------------------------------------------------------------------------
# Kernel 2a: layer-0 matmul (concat fused as two partial matmuls) + stats
# --------------------------------------------------------------------------
def _mlp0_kernel(*refs, has_pts1):
    if has_pts1:
        x1_ref, x2_ref, w1_ref, w2_ref, h_ref, hsum_ref, hsq_ref = refs
    else:
        x2_ref, w2_ref, h_ref, hsum_ref, hsq_ref = refs
        x1_ref = w1_ref = None

    @pl.when(pl.program_id(1) == 0)
    def _():
        hsum_ref[...] = jnp.zeros_like(hsum_ref)
        hsq_ref[...] = jnp.zeros_like(hsq_ref)

    # Fused concat: [pts1, interp] @ W0  ==  pts1 @ W0[:D1] + interp @ W0[D1:]
    h = jnp.dot(x2_ref[0], w2_ref[...], preferred_element_type=jnp.float32)
    if has_pts1:
        h = h + jnp.dot(x1_ref[0], w1_ref[...],
                        preferred_element_type=jnp.float32)

    hsum_ref[0] += jnp.sum(h, axis=0, keepdims=True)
    hsq_ref[0] += jnp.sum(h * h, axis=0, keepdims=True)
    h_ref[0] = h.astype(jnp.bfloat16)


def mlp_layer0(x2, w2, *, x1=None, w1=None, tile_rows):
    """x2: [B,Npad,D2p] bf16 (padded rows zero)   x1: [B,Npad,D1] bf16 or None.
    Returns h [B,Npad,Cout] bf16 and per-batch stat partials [B,1,Cout] f32."""
    B, Npad, D2p = x2.shape
    Cout = w2.shape[1]
    n_tiles = Npad // tile_rows
    has_pts1 = x1 is not None

    in_arrays, in_specs = [], []
    if has_pts1:
        D1 = x1.shape[-1]
        in_arrays.append(x1)
        in_specs.append(pl.BlockSpec((1, tile_rows, D1), lambda b, n: (b, n, 0)))
    in_arrays.append(x2)
    in_specs.append(pl.BlockSpec((1, tile_rows, D2p), lambda b, n: (b, n, 0)))
    if has_pts1:
        in_arrays.append(w1)
        in_specs.append(pl.BlockSpec(w1.shape, lambda b, n: (0, 0)))
    in_arrays.append(w2)
    in_specs.append(pl.BlockSpec(w2.shape, lambda b, n: (0, 0)))

    kern = functools.partial(_mlp0_kernel, has_pts1=has_pts1)
    return pl.pallas_call(
        kern,
        out_shape=(jax.ShapeDtypeStruct((B, Npad, Cout), jnp.bfloat16),
                   jax.ShapeDtypeStruct((B, 1, Cout), jnp.float32),
                   jax.ShapeDtypeStruct((B, 1, Cout), jnp.float32)),
        grid=(B, n_tiles),
        in_specs=in_specs,
        out_specs=(pl.BlockSpec((1, tile_rows, Cout), lambda b, n: (b, n, 0)),
                   pl.BlockSpec((1, 1, Cout), lambda b, n: (b, 0, 0)),
                   pl.BlockSpec((1, 1, Cout), lambda b, n: (b, 0, 0))),
        compiler_params=pltpu.CompilerParams(
            dimension_semantics=("parallel", "arbitrary")),
        cost_estimate=pl.CostEstimate(
            flops=int(2 * B * Npad * (D2p + (x1.shape[-1] if has_pts1 else 0))
                      * Cout + 3 * B * Npad * Cout),
            transcendentals=0,
            bytes_accessed=int(2 * B * Npad * (D2p + Cout) + 8 * B * Cout)),
    )(*in_arrays)


# --------------------------------------------------------------------------
# Kernel 2b: fused BN(prev layer) + ReLU + matmul(this layer) + stats
# --------------------------------------------------------------------------
def _bn_mlp_kernel(u_ref, psum_ref, psq_ref, gamma_ref, beta_ref, w_ref,
                   h_ref, osum_ref, osq_ref, *, rows_total, n_valid, eps):
    @pl.when(pl.program_id(1) == 0)
    def _():
        osum_ref[...] = jnp.zeros_like(osum_ref)
        osq_ref[...] = jnp.zeros_like(osq_ref)

    inv_r = jnp.float32(1.0 / rows_total)
    s1 = jnp.sum(psum_ref[...], axis=0)                 # sum per-batch partials
    s2 = jnp.sum(psq_ref[...], axis=0)                  # (1, Cin)
    mean = s1 * inv_r
    var = jnp.maximum(s2 * inv_r - mean * mean, 0.0)
    scale = gamma_ref[...] * lax.rsqrt(var + eps)
    shift = beta_ref[...] - mean * scale

    u = u_ref[0].astype(jnp.float32)                    # (TR, Cin)
    a = jnp.maximum(u * scale + shift, 0.0)

    if n_valid is not None:
        # Only emitted when row padding exists; cheap (TR,1) mask.
        row0 = pl.program_id(1) * u.shape[0]
        rid = row0 + lax.broadcasted_iota(jnp.int32, (u.shape[0], 1), 0)
        a = a * (rid < n_valid).astype(jnp.float32)

    h = jnp.dot(a.astype(jnp.bfloat16), w_ref[...],
                preferred_element_type=jnp.float32)     # (TR, Cout)
    osum_ref[0] += jnp.sum(h, axis=0, keepdims=True)
    osq_ref[0] += jnp.sum(h * h, axis=0, keepdims=True)
    h_ref[0] = h.astype(jnp.bfloat16)


def bn_mlp_layer(u, psum, psq, gamma2d, beta2d, w_bf16, *,
                 rows_total, n_valid, tile_rows):
    B, Npad, Cin = u.shape
    Cout = w_bf16.shape[1]
    n_tiles = Npad // tile_rows
    kern = functools.partial(_bn_mlp_kernel, rows_total=rows_total,
                             n_valid=n_valid, eps=1e-5)
    return pl.pallas_call(
        kern,
        out_shape=(jax.ShapeDtypeStruct((B, Npad, Cout), jnp.bfloat16),
                   jax.ShapeDtypeStruct((B, 1, Cout), jnp.float32),
                   jax.ShapeDtypeStruct((B, 1, Cout), jnp.float32)),
        grid=(B, n_tiles),
        in_specs=[pl.BlockSpec((1, tile_rows, Cin), lambda b, n: (b, n, 0)),
                  pl.BlockSpec((B, 1, Cin), lambda b, n: (0, 0, 0)),
                  pl.BlockSpec((B, 1, Cin), lambda b, n: (0, 0, 0)),
                  pl.BlockSpec((1, Cin), lambda b, n: (0, 0)),
                  pl.BlockSpec((1, Cin), lambda b, n: (0, 0)),
                  pl.BlockSpec((Cin, Cout), lambda b, n: (0, 0))],
        out_specs=(pl.BlockSpec((1, tile_rows, Cout), lambda b, n: (b, n, 0)),
                   pl.BlockSpec((1, 1, Cout), lambda b, n: (b, 0, 0)),
                   pl.BlockSpec((1, 1, Cout), lambda b, n: (b, 0, 0))),
        compiler_params=pltpu.CompilerParams(
            dimension_semantics=("parallel", "arbitrary")),
        cost_estimate=pl.CostEstimate(
            flops=int(2 * B * Npad * Cin * Cout + 8 * B * Npad * Cin),
            transcendentals=int(Cin),
            bytes_accessed=int(2 * B * Npad * (Cin + Cout) + 2 * Cin * Cout
                               + 16 * B * Cin + 8 * B * Cout)),
    )(u, psum, psq, gamma2d, beta2d, w_bf16)


# --------------------------------------------------------------------------
# Kernel 2c: final BN + ReLU with fused [N,C] -> [C,N] transpose
# --------------------------------------------------------------------------
def _bn_relu_t_kernel(u_ref, psum_ref, psq_ref, gamma_ref, beta_ref, eye_ref,
                      o_ref, *, rows_total, eps):
    inv_r = jnp.float32(1.0 / rows_total)
    s1 = jnp.sum(psum_ref[...], axis=0)
    s2 = jnp.sum(psq_ref[...], axis=0)
    mean = s1 * inv_r
    var = jnp.maximum(s2 * inv_r - mean * mean, 0.0)
    scale = gamma_ref[...] * lax.rsqrt(var + eps)
    shift = beta_ref[...] - mean * scale

    u = u_ref[0].astype(jnp.float32)                    # (TR, C)
    a = jnp.maximum(u * scale + shift, 0.0)

    # Fused transpose on the otherwise-idle MXU: out[c, r] = sum_k I[c,k]*a[r,k]
    # = a[r, c]   (standard dot_general with a transposed-RHS contraction).
    at = lax.dot_general(eye_ref[...], a, (((1,), (1,)), ((), ())),
                         preferred_element_type=jnp.float32)    # (C, TR)
    o_ref[0] = at


def bn_relu_transpose(u, psum, psq, gamma2d, beta2d, *, rows_total, tile_rows):
    B, Npad, C = u.shape
    n_tiles = Npad // tile_rows
    eye = jnp.eye(C, dtype=jnp.float32)
    kern = functools.partial(_bn_relu_t_kernel, rows_total=rows_total, eps=1e-5)
    return pl.pallas_call(
        kern,
        out_shape=jax.ShapeDtypeStruct((B, C, Npad), jnp.float32),
        grid=(B, n_tiles),
        in_specs=[pl.BlockSpec((1, tile_rows, C), lambda b, n: (b, n, 0)),
                  pl.BlockSpec((B, 1, C), lambda b, n: (0, 0, 0)),
                  pl.BlockSpec((B, 1, C), lambda b, n: (0, 0, 0)),
                  pl.BlockSpec((1, C), lambda b, n: (0, 0)),
                  pl.BlockSpec((1, C), lambda b, n: (0, 0)),
                  pl.BlockSpec((C, C), lambda b, n: (0, 0))],
        out_specs=pl.BlockSpec((1, C, tile_rows), lambda b, n: (b, 0, n)),
        compiler_params=pltpu.CompilerParams(
            dimension_semantics=("parallel", "parallel")),
    )(u, psum, psq, gamma2d, beta2d, eye)


# --------------------------------------------------------------------------
# Module wrapper
# --------------------------------------------------------------------------
def init_params(key, in_channel, mlp):
    params = []
    last = in_channel
    for out in mlp:
        key, kw, kb = jax.random.split(key, 3)
        w = jax.random.normal(kw, (last, out), jnp.float32) * (1.0 / last) ** 0.5
        b = jax.random.normal(kb, (out,), jnp.float32) * 0.01
        gamma = jnp.ones((out,), jnp.float32)
        beta = jnp.zeros((out,), jnp.float32)
        params.append((w, b, gamma, beta))
        last = out
    return params


def pointnet_fp_forward(xyz1, xyz2, points1, points2, params, *, tile_rows=256):
    """
    xyz1: [B,3,N]  xyz2: [B,3,S]  points1: [B,D1,N] or None  points2: [B,D2,S]
    returns [B, mlp[-1], N]   (train-mode BatchNorm forward, like the PyTorch
    reference; the Conv1d bias is folded away since train-mode BN cancels it).
    """
    xyz1_t = jnp.transpose(xyz1, (0, 2, 1)).astype(jnp.float32)     # [B,N,3]
    xyz2_f = xyz2.astype(jnp.float32)                               # [B,3,S]
    pts2_t = jnp.transpose(points2, (0, 2, 1))                      # [B,S,D2]

    B, N, _ = xyz1_t.shape
    S = xyz2_f.shape[-1]
    D2 = pts2_t.shape[-1]

    # Row tiling over N (per batch); ensures lane-dense transposed output blocks.
    n8 = _round_up(N, 8)
    TROW = n8 if n8 <= tile_rows else _round_up(tile_rows, 128)
    Npad = _round_up(N, TROW)
    n_valid = None if Npad == N else N
    rows_total = B * N

    # Channel-pad source features to a 128 multiple, cast bf16 once.
    D2p = _round_up(D2, 128)
    pts2_p = jnp.pad(pts2_t.astype(jnp.bfloat16),
                     ((0, 0), (0, 0), (0, D2p - D2)))

    if S == 1:
        interp = jnp.broadcast_to(pts2_p, (B, N, D2p))
        if Npad != N:
            interp = jnp.pad(interp, ((0, 0), (0, Npad - N), (0, 0)))
    else:
        xyz1_p = xyz1_t
        if Npad != N:
            xyz1_p = jnp.pad(xyz1_t, ((0, 0), (0, Npad - N), (0, 0)))
        interp = interpolate_points(xyz1_p, xyz2_f, pts2_p,
                                    n_valid=n_valid, tile_rows=TROW)

    mlp_dims = [p[0].shape[1] for p in params]
    mlp_dims_p = [_round_up(c, 128) for c in mlp_dims]

    # Layer 0: concat fused as two partial matmuls; conv bias dropped (cancels
    # exactly under train-mode BatchNorm).
    w0 = params[0][0]
    C0, C0p = mlp_dims[0], mlp_dims_p[0]
    if points1 is not None:
        D1 = points1.shape[1]
        pts1_t = jnp.transpose(points1, (0, 2, 1)).astype(jnp.bfloat16)
        if Npad != N:
            pts1_t = jnp.pad(pts1_t, ((0, 0), (0, Npad - N), (0, 0)))
        w0a = jnp.pad(w0[:D1], ((0, 0), (0, C0p - C0))).astype(jnp.bfloat16)
        w0b = jnp.pad(w0[D1:], ((0, D2p - D2), (0, C0p - C0))).astype(jnp.bfloat16)
        h, hsum, hsq = mlp_layer0(interp, w0b, x1=pts1_t, w1=w0a,
                                  tile_rows=TROW)
    else:
        w0b = jnp.pad(w0, ((0, D2p - D2), (0, C0p - C0))).astype(jnp.bfloat16)
        h, hsum, hsq = mlp_layer0(interp, w0b, tile_rows=TROW)

    # Middle layers: BN+ReLU of layer i-1 fused into layer i's matmul.
    for i in range(1, len(params)):
        Cin, Cinp = mlp_dims[i - 1], mlp_dims_p[i - 1]
        Cout, Coutp = mlp_dims[i], mlp_dims_p[i]
        gamma = jnp.pad(params[i - 1][2], (0, Cinp - Cin)).reshape(1, Cinp)
        beta = jnp.pad(params[i - 1][3], (0, Cinp - Cin)).reshape(1, Cinp)
        w = jnp.pad(params[i][0],
                    ((0, Cinp - Cin), (0, Coutp - Cout))).astype(jnp.bfloat16)
        h, hsum, hsq = bn_mlp_layer(h, hsum, hsq, gamma, beta, w,
                                    rows_total=rows_total, n_valid=n_valid,
                                    tile_rows=TROW)

    # Final BN + ReLU with the [B,N,C] -> [B,C,N] transpose fused in-kernel.
    CL, CLp = mlp_dims[-1], mlp_dims_p[-1]
    gamma = jnp.pad(params[-1][2], (0, CLp - CL)).reshape(1, CLp)
    beta = jnp.pad(params[-1][3], (0, CLp - CL)).reshape(1, CLp)
    out = bn_relu_transpose(h, hsum, hsq, gamma, beta,
                            rows_total=rows_total, tile_rows=TROW)  # [B,CLp,Npad]
    if CLp != CL or Npad != N:
        out = out[:, :CL, :N]
    return out


# --------------------------------------------------------------------------
# Pure-JAX reference (mirrors the PyTorch module, train-mode BN)
# --------------------------------------------------------------------------
def reference_forward(xyz1, xyz2, points1, points2, params):
    xyz1_t = jnp.transpose(xyz1, (0, 2, 1))
    xyz2_t = jnp.transpose(xyz2, (0, 2, 1))
    pts2_t = jnp.transpose(points2, (0, 2, 1))
    B, N, _ = xyz1_t.shape
    S = xyz2_t.shape[1]
    if S == 1:
        interp = jnp.broadcast_to(pts2_t, (B, N, pts2_t.shape[-1]))
    else:
        d = (-2.0 * jnp.einsum("bnc,bsc->bns", xyz1_t, xyz2_t)
             + jnp.sum(xyz1_t ** 2, -1)[:, :, None]
             + jnp.sum(xyz2_t ** 2, -1)[:, None, :])
        k = min(3, S)
        neg_top, idx = lax.top_k(-d, k)
        recip = 1.0 / (-neg_top + 1e-8)
        wgt = recip / jnp.sum(recip, -1, keepdims=True)
        gathered = jax.vmap(lambda p, i: p[i])(pts2_t, idx)     # (B,N,k,D2)
        interp = jnp.sum(gathered * wgt[..., None], axis=2)
    if points1 is not None:
        x = jnp.concatenate([jnp.transpose(points1, (0, 2, 1)), interp], -1)
    else:
        x = interp
    h = x.reshape(B * N, -1)
    for (w, b, gamma, beta) in params:
        h = h @ w + b
        mean = jnp.mean(h, axis=0)
        var = jnp.mean((h - mean) ** 2, axis=0)
        h = jnp.maximum((h - mean) / jnp.sqrt(var + 1e-5) * gamma + beta, 0.0)
    return jnp.transpose(h.reshape(B, N, -1), (0, 2, 1))


# --------------------------------------------------------------------------
if __name__ == "__main__":
    key = jax.random.PRNGKey(0)
    B, N, S = 2, 16, 8
    D1, D2 = 4, 6
    in_channel = D1 + D2
    mlp = [16, 8]

    k1, k2, k3, k4, kp = jax.random.split(key, 5)
    xyz1 = jax.random.normal(k1, (B, 3, N), jnp.float32)
    xyz2 = jax.random.normal(k2, (B, 3, S), jnp.float32)
    points1 = jax.random.normal(k3, (B, D1, N), jnp.float32)
    points2 = jax.random.normal(k4, (B, D2, S), jnp.float32)

    params = init_params(kp, in_channel, mlp)

    out = pointnet_fp_forward(xyz1, xyz2, points1, points2, params)
    out = jax.block_until_ready(out)
    assert out.shape == (B, mlp[-1], N), out.shape
    assert bool(jnp.all(jnp.isfinite(out))), "non-finite output"

    ref = jax.block_until_ready(
        reference_forward(xyz1, xyz2, points1, points2, params))
    max_err = float(jnp.max(jnp.abs(out - ref)))
    assert max_err < 0.2, f"mismatch vs reference: max |err| = {max_err}"

    print("KERNEL_OK")
</pallas_src>

<mosaic_0001>
module attributes {stable_mosaic.version = 11 : i64} {
  func.func @_interp_kernel(%arg0: i32, %arg1: i32, %arg2: memref<1x16x3xf32, #tpu.memory_space<vmem>>, %arg3: memref<1x3x8xf32, #tpu.memory_space<vmem>>, %arg4: memref<1x8x128xbf16, #tpu.memory_space<vmem>>, %arg5: memref<1x16x128xbf16, #tpu.memory_space<vmem>>) attributes {dimension_semantics = [#tpu.dimension_semantics<parallel>, #tpu.dimension_semantics<parallel>], iteration_bounds = array<i64: 2, 1>, scalar_prefetch = 0 : i64, scratch_operands = 0 : i64, tpu.core_type = #tpu.core_type<tc>, window_params = [{transform_indices = @transform_0, window_bounds = array<i64: 1, 16, 3>}, {transform_indices = @transform_1, window_bounds = array<i64: 1, 3, 8>}, {transform_indices = @transform_2, window_bounds = array<i64: 1, 8, 128>}, {transform_indices = @transform_3, window_bounds = array<i64: 1, 16, 128>}]} {
    %c0 = arith.constant 0 : index
    %c0_0 = arith.constant 0 : index
    %c0_1 = arith.constant 0 : index
    %0 = vector.load %arg2[%c0, %c0_0, %c0_1] : memref<1x16x3xf32, #tpu.memory_space<vmem>>, vector<1x16x3xf32>
    %1 = vector.shape_cast %0 : vector<1x16x3xf32> to vector<16x3xf32>
    %c0_2 = arith.constant 0 : index
    %c0_3 = arith.constant 0 : index
    %c0_4 = arith.constant 0 : index
    %2 = vector.load %arg3[%c0_2, %c0_3, %c0_4] : memref<1x3x8xf32, #tpu.memory_space<vmem>>, vector<1x3x8xf32>
    %3 = vector.shape_cast %2 : vector<1x3x8xf32> to vector<3x8xf32>
    %cst = arith.constant 0.000000e+00 : f32
    %4 = vector.broadcast %cst : f32 to vector<16x8xf32>
    %5 = vector.extract_strided_slice %1 {offsets = [0, 0], sizes = [16, 1], strides = [1, 1]} : vector<16x3xf32> to vector<16x1xf32>
    %6 = vector.extract_strided_slice %3 {offsets = [0, 0], sizes = [1, 8], strides = [1, 1]} : vector<3x8xf32> to vector<1x8xf32>
    %7 = vector.broadcast %5 : vector<16x1xf32> to vector<16x8xf32>
    %8 = vector.broadcast %6 : vector<1x8xf32> to vector<16x8xf32>
    %9 = arith.subf %7, %8 : vector<16x8xf32>
    %10 = arith.mulf %9, %9 : vector<16x8xf32>
    %11 = arith.addf %4, %10 : vector<16x8xf32>
    %12 = vector.extract_strided_slice %1 {offsets = [0, 1], sizes = [16, 1], strides = [1, 1]} : vector<16x3xf32> to vector<16x1xf32>
    %13 = vector.extract_strided_slice %3 {offsets = [1, 0], sizes = [1, 8], strides = [1, 1]} : vector<3x8xf32> to vector<1x8xf32>
    %14 = vector.broadcast %12 : vector<16x1xf32> to vector<16x8xf32>
    %15 = vector.broadcast %13 : vector<1x8xf32> to vector<16x8xf32>
    %16 = arith.subf %14, %15 : vector<16x8xf32>
    %17 = arith.mulf %16, %16 : vector<16x8xf32>
    %18 = arith.addf %11, %17 : vector<16x8xf32>
    %19 = vector.extract_strided_slice %1 {offsets = [0, 2], sizes = [16, 1], strides = [1, 1]} : vector<16x3xf32> to vector<16x1xf32>
    %20 = vector.extract_strided_slice %3 {offsets = [2, 0], sizes = [1, 8], strides = [1, 1]} : vector<3x8xf32> to vector<1x8xf32>
    %21 = vector.broadcast %19 : vector<16x1xf32> to vector<16x8xf32>
    %22 = vector.broadcast %20 : vector<1x8xf32> to vector<16x8xf32>
    %23 = arith.subf %21, %22 : vector<16x8xf32>
    %24 = arith.mulf %23, %23 : vector<16x8xf32>
    %25 = arith.addf %18, %24 : vector<16x8xf32>
    %26 = tpu.iota {dimensions = array<i32: 1>} : vector<16x8xi32>
    %27 = tpu.bitcast %25 : vector<16x8xf32> -> vector<16x8xi32>
    %c-8_i32 = arith.constant -8 : i32
    %28 = vector.broadcast %c-8_i32 : i32 to vector<16x8xi32>
    %29 = arith.andi %27, %28 : vector<16x8xi32>
    %30 = arith.ori %29, %26 : vector<16x8xi32>
    %cst_5 = arith.constant 0.000000e+00 : f32
    %31 = vector.broadcast %cst_5 : f32 to vector<16x8xf32>
    %cst_6 = arith.constant 0.000000e+00 : f32
    %32 = vector.broadcast %cst_6 : f32 to vector<16x1xf32>
    %cst_7 = arith.constant dense<2147483647> : vector<16xi32>
    %33 = vector.multi_reduction <minsi>, %30, %cst_7 [1] : vector<16x8xi32> to vector<16xi32>
    %34 = vector.shape_cast %33 : vector<16xi32> to vector<16x1xi32>
    %c7_i32 = arith.constant 7 : i32
    %35 = vector.broadcast %c7_i32 : i32 to vector<16x1xi32>
    %36 = arith.andi %34, %35 : vector<16x1xi32>
    %c-8_i32_8 = arith.constant -8 : i32
    %37 = vector.broadcast %c-8_i32_8 : i32 to vector<16x1xi32>
    %38 = arith.andi %34, %37 : vector<16x1xi32>
    %39 = tpu.bitcast %38 : vector<16x1xi32> -> vector<16x1xf32>
    %cst_9 = arith.constant 9.99999993E-9 : f32
    %40 = vector.broadcast %cst_9 : f32 to vector<16x1xf32>
    %41 = arith.addf %39, %40 : vector<16x1xf32>
    %42 = tpu.reciprocal %41 {approx = true} : vector<16x1xf32> -> vector<16x1xf32>
    %43 = vector.broadcast %36 : vector<16x1xi32> to vector<16x8xi32>
    %44 = arith.cmpi eq, %26, %43 : vector<16x8xi32>
    %cst_10 = arith.constant 0.000000e+00 : f32
    %45 = vector.shape_cast %42 : vector<16x1xf32> to vector<16x1xf32>
    %46 = vector.broadcast %45 : vector<16x1xf32> to vector<16x8xf32>
    %47 = vector.broadcast %cst_10 : f32 to vector<16x8xf32>
    %48 = arith.select %44, %46, %47 : vector<16x8xi1>, vector<16x8xf32>
    %49 = arith.addf %31, %48 : vector<16x8xf32>
    %50 = arith.addf %32, %42 : vector<16x1xf32>
    %c2147483647_i32 = arith.constant 2147483647 : i32
    %51 = vector.broadcast %c2147483647_i32 : i32 to vector<16x8xi32>
    %52 = arith.select %44, %51, %30 : vector<16x8xi1>, vector<16x8xi32>
    %cst_11 = arith.constant dense<2147483647> : vector<16xi32>
    %53 = vector.multi_reduction <minsi>, %52, %cst_11 [1] : vector<16x8xi32> to vector<16xi32>
    %54 = vector.shape_cast %53 : vector<16xi32> to vector<16x1xi32>
    %c7_i32_12 = arith.constant 7 : i32
    %55 = vector.broadcast %c7_i32_12 : i32 to vector<16x1xi32>
    %56 = arith.andi %54, %55 : vector<16x1xi32>
    %c-8_i32_13 = arith.constant -8 : i32
    %57 = vector.broadcast %c-8_i32_13 : i32 to vector<16x1xi32>
    %58 = arith.andi %54, %57 : vector<16x1xi32>
    %59 = tpu.bitcast %58 : vector<16x1xi32> -> vector<16x1xf32>
    %cst_14 = arith.constant 9.99999993E-9 : f32
    %60 = vector.broadcast %cst_14 : f32 to vector<16x1xf32>
    %61 = arith.addf %59, %60 : vector<16x1xf32>
    %62 = tpu.reciprocal %61 {approx = true} : vector<16x1xf32> -> vector<16x1xf32>
    %63 = vector.broadcast %56 : vector<16x1xi32> to vector<16x8xi32>
    %64 = arith.cmpi eq, %26, %63 : vector<16x8xi32>
    %cst_15 = arith.constant 0.000000e+00 : f32
    %65 = vector.shape_cast %62 : vector<16x1xf32> to vector<16x1xf32>
    %66 = vector.broadcast %65 : vector<16x1xf32> to vector<16x8xf32>
    %67 = vector.broadcast %cst_15 : f32 to vector<16x8xf32>
    %68 = arith.select %64, %66, %67 : vector<16x8xi1>, vector<16x8xf32>
    %69 = arith.addf %49, %68 : vector<16x8xf32>
    %70 = arith.addf %50, %62 : vector<16x1xf32>
    %c2147483647_i32_16 = arith.constant 2147483647 : i32
    %71 = vector.broadcast %c2147483647_i32_16 : i32 to vector<16x8xi32>
    %72 = arith.select %64, %71, %52 : vector<16x8xi1>, vector<16x8xi32>
    %cst_17 = arith.constant dense<2147483647> : vector<16xi32>
    %73 = vector.multi_reduction <minsi>, %72, %cst_17 [1] : vector<16x8xi32> to vector<16xi32>
    %74 = vector.shape_cast %73 : vector<16xi32> to vector<16x1xi32>
    %c7_i32_18 = arith.constant 7 : i32
    %75 = vector.broadcast %c7_i32_18 : i32 to vector<16x1xi32>
    %76 = arith.andi %74, %75 : vector<16x1xi32>
    %c-8_i32_19 = arith.constant -8 : i32
    %77 = vector.broadcast %c-8_i32_19 : i32 to vector<16x1xi32>
    %78 = arith.andi %74, %77 : vector<16x1xi32>
    %79 = tpu.bitcast %78 : vector<16x1xi32> -> vector<16x1xf32>
    %cst_20 = arith.constant 9.99999993E-9 : f32
    %80 = vector.broadcast %cst_20 : f32 to vector<16x1xf32>
    %81 = arith.addf %79, %80 : vector<16x1xf32>
    %82 = tpu.reciprocal %81 {approx = true} : vector<16x1xf32> -> vector<16x1xf32>
    %83 = vector.broadcast %76 : vector<16x1xi32> to vector<16x8xi32>
    %84 = arith.cmpi eq, %26, %83 : vector<16x8xi32>
    %cst_21 = arith.constant 0.000000e+00 : f32
    %85 = vector.shape_cast %82 : vector<16x1xf32> to vector<16x1xf32>
    %86 = vector.broadcast %85 : vector<16x1xf32> to vector<16x8xf32>
    %87 = vector.broadcast %cst_21 : f32 to vector<16x8xf32>
    %88 = arith.select %84, %86, %87 : vector<16x8xi1>, vector<16x8xf32>
    %89 = arith.addf %69, %88 : vector<16x8xf32>
    %90 = arith.addf %70, %82 : vector<16x1xf32>
    %91 = tpu.reciprocal %90 {approx = true} : vector<16x1xf32> -> vector<16x1xf32>
    %92 = vector.broadcast %91 : vector<16x1xf32> to vector<16x8xf32>
    %93 = arith.mulf %89, %92 : vector<16x8xf32>
    %94 = arith.truncf %93 : vector<16x8xf32> to vector<16x8xbf16>
    %c0_22 = arith.constant 0 : index
    %c0_23 = arith.constant 0 : index
    %c0_24 = arith.constant 0 : index
    %95 = vector.load %arg4[%c0_22, %c0_23, %c0_24] : memref<1x8x128xbf16, #tpu.memory_space<vmem>>, vector<1x8x128xbf16>
    %96 = vector.shape_cast %95 : vector<1x8x128xbf16> to vector<8x128xbf16>
    %cst_25 = arith.constant dense<0.000000e+00> : vector<16x128xf32>
    %97 = tpu.matmul %94, %96, %cst_25 {dimension_numbers = #tpu.dot_dimension_numbers<[1], [0], [0], [1], [0, 0, 1, 1], [], []>} : vector<16x8xbf16>, vector<8x128xbf16>, vector<16x128xf32> -> vector<16x128xf32>
    %98 = arith.truncf %97 : vector<16x128xf32> to vector<16x128xbf16>
    %c0_26 = arith.constant 0 : index
    %c0_27 = arith.constant 0 : index
    %c0_28 = arith.constant 0 : index
    %99 = vector.load %arg5[%c0_26, %c0_27, %c0_28] : memref<1x16x128xbf16, #tpu.memory_space<vmem>>, vector<1x16x128xbf16>
    %100 = vector.shape_cast %99 : vector<1x16x128xbf16> to vector<16x128xbf16>
    %101 = vector.shape_cast %98 : vector<16x128xbf16> to vector<1x16x128xbf16>
    tpu.vector_store %arg5[%c0_26, %c0_27, %c0_28], %101 {strides = array<i32>} : memref<1x16x128xbf16, #tpu.memory_space<vmem>>, vector<1x16x128xbf16>,
    return
  }
  func.func @transform_0(%arg0: i32, %arg1: i32) -> (i32, i32, i32) {
    %c0_i32 = arith.constant 0 : i32
    %c0_i32_0 = arith.constant 0 : i32
    return %arg0, %arg1, %c0_i32 : i32, i32, i32
  }
  func.func @transform_1(%arg0: i32, %arg1: i32) -> (i32, i32, i32) {
    %c0_i32 = arith.constant 0 : i32
    %c0_i32_0 = arith.constant 0 : i32
    %c0_i32_1 = arith.constant 0 : i32
    return %arg0, %c0_i32, %c0_i32_0 : i32, i32, i32
  }
  func.func @transform_2(%arg0: i32, %arg1: i32) -> (i32, i32, i32) {
    %c0_i32 = arith.constant 0 : i32
    %c0_i32_0 = arith.constant 0 : i32
    %c0_i32_1 = arith.constant 0 : i32
    return %arg0, %c0_i32, %c0_i32_0 : i32, i32, i32
  }
  func.func @transform_3(%arg0: i32, %arg1: i32) -> (i32, i32, i32) {
    %c0_i32 = arith.constant 0 : i32
    %c0_i32_0 = arith.constant 0 : i32
    return %arg0, %arg1, %c0_i32 : i32, i32, i32
  }
}

</mosaic_0001>

<llo_original>
// kernel: tpu_custom_call.1
$region0: #{tpu_custom_call.1}
  #allocation0 [shape = 'u32[]', space=smem, size = 0x4, offset = 0x4, fixed_abs, tag = 'smem constant byte address 0x4 - core index']
  #allocation1 [shape = 'u32[72,128]{1,0:T(1,128)}', space=vmem, size = 0x9000, scoped, tag = 'internal scratch']
  %s0 = inlined_call_operand.vmem [shape: f32[2,16,3], index: 0, kind: input, shape index: {}]
  %s1 = inlined_call_operand.vmem [shape: f32[2,3,8], index: 1, kind: input, shape index: {}]
  %s2 = inlined_call_operand.vmem [shape: bf16[2,8,128], index: 2, kind: input, shape index: {}]
  %s3 = inlined_call_operand.hbm [shape: bf16[2,16,128], index: 3, kind: output, shape index: {}]
  %s4 = sld [smem:[#allocation0]]
  $region45: #{tpu_custom_call.1} parent=0
    _
  %s6 = ssub.s32 1, %s4
  %s7 = scalar_select 0, %s6, %s4
  $region1: #{tpu_custom_call.1} parent=0
    #allocation2 [shape = 'u8[8192]{0}', space=vmem, size = 0x2000, scoped, tag = 'output window, operand 0']
    #allocation3 [shape = 's32[2]{0}', space=sflag, size = 0x8, scoped, tag = 'scoped memory for tpu_custom_call.1']
    %8 = vsyncpa [#allocation3], 0
    %s9 = scalar_lea.sflag [#allocation3], 1
    %10 = vsyncpa %s9, 0
    loop: start=0, step=1, limit=4
    $region2: #{tpu_custom_call.1} parent=1 // loop_pre_header
      _
    $region3: #{tpu_custom_call.1} parent=1 // loop_header
      %s12 = sphi 0, %s16
      %p13 = scmp.ge.s32.totalorder %s12, 4
      %s19 = sphi 0, %s31
      %s20 = sphi 0, %s27
      %s21 = sphi 0, %s19
      %s22 = sphi 0, %s20
      %s23 = sphi 0, %s21
      %s24 = sphi 0, %s22
      %s36 = sphi 0, %s38
      %s39 = sphi 0, %s36
      %s40 = sphi 0, %s39
      %s56 = sphi 0, %s40
      %s62 = sphi 0, %s64
      %s65 = sphi 0, %s62
      %s66 = sphi 0, %s65
      %s82 = sphi 0, %s66
      %s88 = sphi 0, %s90
      %s91 = sphi 0, %s88
      %s92 = sphi 0, %s91
      %s108 = sphi 0, %s92
      %s116 = sphi 0, %s118
      %s119 = sphi 0, %s116
      %s120 = sphi 0, %s119
      %s136 = sphi 0, %s120
    $region4: #{tpu_custom_call.1} parent=1 // loop_header_branch
      %15 = sbr.rel (%p13) target = $region8
    $region5: #{tpu_custom_call.1} parent=1 // loop_body
      %s17 = ssub.s32 %s12, 1
      %s18 = ssub.s32 %s12, 2
      %s25 = sadd.s32 1, %s20
      %p26 = scmp.ge.s32.totalorder %s25, 1
      %s27 = scalar_select %p26, 0, %s25
      %s28 = sadd.s32 1, %s19
      %s29 = scalar_select %p26, %s28, %s19
      %p30 = scmp.ge.s32.totalorder %s29, 2
      %s31 = scalar_select %p30, 0, %s29
      %s32 = ssub.s32 %s19, %s31
      %s33 = ssub.s32 %s20, %s27
      %s34 = sor.u32 %s32, %s33
      %p35 = scmp.eq.s32.totalorder %s34, 0
      %s37 = sadd.s32 %s36, 1
      %s38 = scalar_select %p35, %s36, %s37
      %p41 = pneg %p35
      %p42 = scmp.eq.s32.totalorder %s12, 1
      %p43 = por %p41, %p42
      %p44 = scmp.ne.s32.totalorder %s36, %s39
      %p45 = scmp.eq.s32.totalorder %s12, 0
      %p46 = por %p44, %p45
      %p47 = scmp.ne.s32.totalorder %s36, %s39
      %p48 = scmp.eq.s32.totalorder %s17, 1
      %p49 = por %p47, %p48
      %p50 = scmp.ne.s32.totalorder %s39, %s40
      %p51 = scmp.eq.s32.totalorder %s17, 0
      %p52 = por %p50, %p51
      %p53 = scmp.ne.s32.totalorder %s39, %s40
      %p54 = scmp.eq.s32.totalorder %s18, 1
      %p55 = por %p53, %p54
      %p57 = scmp.ne.s32.totalorder %s40, %s56
      %p58 = scmp.eq.s32.totalorder %s18, 0
      %p59 = por %p57, %p58
      %s60 = ssub.s32 %s19, %s31
      %p61 = scmp.eq.s32.totalorder %s60, 0
      %s63 = sadd.s32 %s62, 1
      %s64 = scalar_select %p61, %s62, %s63
      %p67 = pneg %p61
      %p68 = scmp.eq.s32.totalorder %s12, 1
      %p69 = por %p67, %p68
      %p70 = scmp.ne.s32.totalorder %s62, %s65
      %p71 = scmp.eq.s32.totalorder %s12, 0
      %p72 = por %p70, %p71
      %p73 = scmp.ne.s32.totalorder %s62, %s65
      %p74 = scmp.eq.s32.totalorder %s17, 1
      %p75 = por %p73, %p74
      %p76 = scmp.ne.s32.totalorder %s65, %s66
      %p77 = scmp.eq.s32.totalorder %s17, 0
      %p78 = por %p76, %p77
      %p79 = scmp.ne.s32.totalorder %s65, %s66
      %p80 = scmp.eq.s32.totalorder %s18, 1
      %p81 = por %p79, %p80
      %p83 = scmp.ne.s32.totalorder %s66, %s82
      %p84 = scmp.eq.s32.totalorder %s18, 0
      %p85 = por %p83, %p84
      %s86 = ssub.s32 %s19, %s31
      %p87 = scmp.eq.s32.totalorder %s86, 0
      %s89 = sadd.s32 %s88, 1
      %s90 = scalar_select %p87, %s88, %s89
      %p93 = pneg %p87
      %p94 = scmp.eq.s32.totalorder %s12, 1
      %p95 = por %p93, %p94
      %p96 = scmp.ne.s32.totalorder %s88, %s91
      %p97 = scmp.eq.s32.totalorder %s12, 0
      %p98 = por %p96, %p97
      %p99 = scmp.ne.s32.totalorder %s88, %s91
      %p100 = scmp.eq.s32.totalorder %s17, 1
      %p101 = por %p99, %p100
      %p102 = scmp.ne.s32.totalorder %s91, %s92
      %p103 = scmp.eq.s32.totalorder %s17, 0
      %p104 = por %p102, %p103
      %p105 = scmp.ne.s32.totalorder %s91, %s92
      %p106 = scmp.eq.s32.totalorder %s18, 1
      %p107 = por %p105, %p106
      %p109 = scmp.ne.s32.totalorder %s92, %s108
      %p110 = scmp.eq.s32.totalorder %s18, 0
      %p111 = por %p109, %p110
      %s112 = ssub.s32 %s19, %s31
      %s113 = ssub.s32 %s20, %s27
      %s114 = sor.u32 %s112, %s113
      %p115 = scmp.eq.s32.totalorder %s114, 0
      %s117 = sadd.s32 %s116, 1
      %s118 = scalar_select %p115, %s116, %s117
      %p121 = pneg %p115
      %p122 = scmp.eq.s32.totalorder %s12, 1
      %p123 = por %p121, %p122
      %p124 = scmp.ne.s32.totalorder %s116, %s119
      %p125 = scmp.eq.s32.totalorder %s12, 0
      %p126 = por %p124, %p125
      %p127 = scmp.ne.s32.totalorder %s116, %s119
      %p128 = scmp.eq.s32.totalorder %s17, 1
      %p129 = por %p127, %p128
      %p130 = scmp.ne.s32.totalorder %s119, %s120
      %p131 = scmp.eq.s32.totalorder %s17, 0
      %p132 = por %p130, %p131
      %p133 = scmp.ne.s32.totalorder %s119, %s120
      %p134 = scmp.eq.s32.totalorder %s18, 1
      %p135 = por %p133, %p134
      %p137 = scmp.ne.s32.totalorder %s120, %s136
      %p138 = scmp.eq.s32.totalorder %s18, 0
      %p139 = por %p137, %p138
      %p140 = scmp.le.s32.totalorder 1, %s12
      %p141 = scmp.lt.s32.totalorder %s12, 3
      %p142 = pnand %p140, %p141
      %p143 = pneg %p142
      // Predicated region
      $region9: #{tpu_custom_call.1} parent=5 // pred_check
        _
      $region10: #{tpu_custom_call.1} parent=5 // pred_check_branch
        %145 = sbr.rel (%p142) target = $region12
      $region11: #{tpu_custom_call.1} parent=5 // pred_region
        %s146 = ssub.s32 %s12, 1
      $region12: #{tpu_custom_call.1} parent=5 // pred_fallthru
        _
      %p147 = scmp.lt.s32.totalorder %s12, 2
      // Predicated region
      $region13: #{tpu_custom_call.1} parent=5 // pred_check
        %p148 = pneg %p147
      $region14: #{tpu_custom_call.1} parent=5 // pred_check_branch
        %150 = sbr.rel (%p148) target = $region16
      $region15: #{tpu_custom_call.1} parent=5 // pred_region
        // Predicated region
        $region17: #{tpu_custom_call.1} parent=15 // pred_check
          %p151 = pneg %p46
        $region18: #{tpu_custom_call.1} parent=15 // pred_check_branch
          %153 = sbr.rel (%p151) target = $region20
        $region19: #{tpu_custom_call.1} parent=15 // pred_region
          %s154 = smul.u32 2, %s20
          %p155 = scmp.lt.s32.totalorder %s19, 1
          %s156 = scalar_select %p155, %s19, 1
          %p157 = scmp.lt.s32.totalorder %s154, 1
          %s158 = scalar_select %p157, %s154, 1
          %s159 = smul.addr %s156, 2
          %s160 = sadd.s32 %s158, %s159
          %s161 = smul.addr %s160, 8
          %s162 = scalar_lea.vmem %s0, %s161
          %s163 = smul.u32 2, %s20
        $region20: #{tpu_custom_call.1} parent=15 // pred_fallthru
          _
        // Predicated region
        $region21: #{tpu_custom_call.1} parent=15 // pred_check
          %p164 = pneg %p72
        $region22: #{tpu_custom_call.1} parent=15 // pred_check_branch
          %166 = sbr.rel (%p164) target = $region24
        $region23: #{tpu_custom_call.1} parent=15 // pred_region
          %p167 = scmp.lt.s32.totalorder %s19, 1
          %s168 = scalar_select %p167, %s19, 1
          %s169 = smul.addr %s168, 4
          %s170 = scalar_lea.vmem %s1, %s169
        $region24: #{tpu_custom_call.1} parent=15 // pred_fallthru
          _
        // Predicated region
        $region25: #{tpu_custom_call.1} parent=15 // pred_check
          %p171 = pneg %p98
        $region26: #{tpu_custom_call.1} parent=15 // pred_check_branch
          %173 = sbr.rel (%p171) target = $region28
        $region27: #{tpu_custom_call.1} parent=15 // pred_region
          %p174 = scmp.lt.s32.totalorder %s19, 1
          %s175 = scalar_select %p174, %s19, 1
          %s176 = smul.addr %s175, 4
          %s177 = scalar_lea.vmem %s2, %s176
        $region28: #{tpu_custom_call.1} parent=15 // pred_fallthru
          _
      $region16: #{tpu_custom_call.1} parent=5 // pred_fallthru
        _
      %p178 = scmp.le.s32.totalorder 1, %s12
      %p179 = scmp.lt.s32.totalorder %s12, 3
      %p180 = pnand %p178, %p179
      %p181 = pneg %p180
      // Predicated region
      $region29: #{tpu_custom_call.1} parent=5 // pred_check
        _
      $region30: #{tpu_custom_call.1} parent=5 // pred_check_branch
        %183 = sbr.rel (%p180) target = $region32
      $region31: #{tpu_custom_call.1} parent=5 // pred_region
        %s184 = ssub.s32 %s12, 1
        %s185 = smul.u32 2, %s22
        %p186 = scmp.lt.s32.totalorder %s21, 1
        %s187 = scalar_select %p186, %s21, 1
        %p188 = scmp.lt.s32.totalorder %s185, 1
        %s189 = scalar_select %p188, %s185, 1
        %s190 = smul.addr %s187, 2
        %s191 = sadd.s32 %s189, %s190
        %s192 = smul.addr %s191, 8
        %s193 = scalar_lea.vmem %s0, %s192
        %p194 = pneg %p52
        %p195 = pneg %p49
        %p196 = scmp.lt.s32.totalorder %s21, 1
        %s197 = scalar_select %p196, %s21, 1
        %s198 = smul.addr %s197, 4
        %s199 = scalar_lea.vmem %s1, %s198
        %p200 = pneg %p78
        %p201 = pneg %p75
        %p202 = scmp.lt.s32.totalorder %s21, 1
        %s203 = scalar_select %p202, %s21, 1
        %s204 = smul.addr %s203, 4
        %s205 = scalar_lea.vmem %s2, %s204
        %p206 = pneg %p104
        %p207 = pneg %p101
        %p208 = pneg %p132
        %p209 = pneg %p129
        %s210 = sand.u32 %s119, 1
        %s211 = scalar_lea.sflag [#allocation3], %s210
        %s212 = sand.u32 %s119, 1
        %s213 = smul.addr %s212, 8
        %s214 = scalar_lea.vmem [#allocation2], %s213
        %s215 = smul.u32 2, %s22
        %p216 = scmp.lt.s32.totalorder %s21, 1
        %s217 = scalar_select %p216, %s21, 1
        %p218 = scmp.lt.s32.totalorder %s215, 1
        %s219 = scalar_select %p218, %s215, 1
        %s220 = smul.addr %s217, 2
        %s221 = sadd.s32 %s219, %s220
        %s222 = smul.addr %s221, 8
        %s223 = scalar_lea.vmem %s0, %s222
        %s224 = smul.u32 2, %s22
        %p225 = scmp.lt.s32.totalorder %s21, 1
        %s226 = scalar_select %p225, %s21, 1
        %s227 = smul.addr %s226, 4
        %s228 = scalar_lea.vmem %s1, %s227
        %p229 = scmp.lt.s32.totalorder %s21, 1
        %s230 = scalar_select %p229, %s21, 1
        %s231 = smul.addr %s230, 4
        %s232 = scalar_lea.vmem %s2, %s231
        %s233 = smul.u32 2, %s22
        %v235 = vld [vmem:[%s223] sm:$0xff]
        %v236 = vld [vmem:[%s223 + $0x8] sm:$0xff]
        %v237 = vld [vmem:[%s228] sm:$0x7]
        %239 = vset.pattern.permute.xlu0 0
        %240 = vperm.xlu0 %239, %v235
        %v241 = vpop.permute.xlu0 %240
        %244 = vset.pattern.permute.xlu0 0
        %245 = vperm.xlu0 %244, %v236
        %v246 = vpop.permute.xlu0 %245
        %v248 = vperm.slane %v237, 0
        %v249 = vsub.f32 %v241, %v248
        %v250 = vsub.f32 %v246, %v248
        %v251 = vmul.f32 %v249, %v249
        %v252 = vmul.f32 %v250, %v250
        %v253 = vadd.f32 %v251, 0.0
        %v254 = vadd.f32 %v252, 0.0
        %255 = vset.pattern.permute.xlu0 1
        %256 = vperm.xlu0 %255, %v235
        %v257 = vpop.permute.xlu0 %256
        %259 = vset.pattern.permute.xlu0 1
        %260 = vperm.xlu0 %259, %v236
        %v261 = vpop.permute.xlu0 %260
        %v263 = vperm.slane %v237, 1
        %v264 = vsub.f32 %v257, %v263
        %v265 = vsub.f32 %v261, %v263
        %v266 = vmul.f32 %v264, %v264
        %v267 = vmul.f32 %v265, %v265
        %v268 = vadd.f32 %v253, %v266
        %v269 = vadd.f32 %v254, %v267
        %270 = vset.pattern.permute.xlu0 2
        %271 = vperm.xlu0 %270, %v235
        %v272 = vpop.permute.xlu0 %271
        %274 = vset.pattern.permute.xlu0 2
        %275 = vperm.xlu0 %274, %v236
        %v276 = vpop.permute.xlu0 %275
        %v278 = vperm.slane %v237, 2
        %v279 = vsub.f32 %v272, %v278
        %v280 = vsub.f32 %v276, %v278
        %v281 = vmul.f32 %v279, %v279
        %v282 = vmul.f32 %v280, %v280
        %v283 = vadd.f32 %v268, %v281
        %v284 = vadd.f32 %v269, %v282
        %v285 = vlaneseq
        %v286 = vand.u32 %v285, 127
        %v289 = vand.u32 %v283, 4294967288
        %v290 = vand.u32 %v284, 4294967288
        %v291 = vor.u32 %v289, %v286
        %v292 = vor.u32 %v290, %v286
        %vm293 = vcmask 64512
        %v294 = vsel %vm293, %v291, 2147483647
        %v295 = vand.u32 %v294, 65535
        %v296 = vshra.s32 %v294, 16
        %v297 = vcvt.s32.f32 %v295
        %v298 = vcvt.s32.f32 %v296
        %299 = vmin.xlane.f32.xlu0 %v298
        %v300 = vpop.xlane.xlu0 %299
        %vm301 = vcmp.eq.f32.partialorder %v298, %v300
        %v302 = vsel %vm301, %v297, inf
        %303 = vmin.xlane.f32.xlu0 %v302
        %v304 = vpop.xlane.xlu0 %303
        %v305 = vcvt.f32.s32 %v304
        %v306 = vcvt.f32.s32 %v300
        %v307 = vshll.u32 %v306, 16
        %v308 = vadd.s32 %v307, %v305
        %v309 = vsel %vm293, %v292, 2147483647
        %v310 = vand.u32 %v309, 65535
        %v311 = vshra.s32 %v309, 16
        %v312 = vcvt.s32.f32 %v310
        %v313 = vcvt.s32.f32 %v311
        %314 = vmin.xlane.f32.xlu0 %v313
        %v315 = vpop.xlane.xlu0 %314
        %vm316 = vcmp.eq.f32.partialorder %v313, %v315
        %v317 = vsel %vm316, %v312, inf
        %318 = vmin.xlane.f32.xlu0 %v317
        %v319 = vpop.xlane.xlu0 %318
        %v320 = vcvt.f32.s32 %v319
        %v321 = vcvt.f32.s32 %v315
        %v322 = vshll.u32 %v321, 16
        %v323 = vadd.s32 %v322, %v320
        %v324 = vand.u32 %v308, 7
        %v325 = vand.u32 %v323, 7
        %v326 = vand.u32 %v308, 4294967288
        %v327 = vand.u32 %v323, 4294967288
        %v330 = vadd.f32 %v326, 1e-08
        %v331 = vadd.f32 %v327, 1e-08
        %v332 = vrcp.pop %v330
        %v333 = vrcp.pop %v331
        %vm334 = vcmp.eq.s32.totalorder %v286, %v324
        %vm335 = vcmp.eq.s32.totalorder %v286, %v325
        %v336 = vsel %vm334, %v332, 0.0
        %v337 = vsel %vm335, %v333, 0.0
        %v338 = vadd.f32 %v336, 0.0
        %v339 = vadd.f32 %v337, 0.0
        %v340 = vadd.f32 %v332, 0.0
        %v341 = vadd.f32 %v333, 0.0
        %v342 = vsel %vm334, 2147483647, %v291
        %v343 = vsel %vm335, 2147483647, %v292
        %v344 = vsel %vm293, %v342, 2147483647
        %v345 = vand.u32 %v344, 65535
        %v346 = vshra.s32 %v344, 16
        %v347 = vcvt.s32.f32 %v345
        %v348 = vcvt.s32.f32 %v346
        %349 = vmin.xlane.f32.xlu0 %v348
        %v350 = vpop.xlane.xlu0 %349
        %vm351 = vcmp.eq.f32.partialorder %v348, %v350
        %v352 = vsel %vm351, %v347, inf
        %353 = vmin.xlane.f32.xlu0 %v352
        %v354 = vpop.xlane.xlu0 %353
        %v355 = vcvt.f32.s32 %v354
        %v356 = vcvt.f32.s32 %v350
        %v357 = vshll.u32 %v356, 16
        %v358 = vadd.s32 %v357, %v355
        %v359 = vsel %vm293, %v343, 2147483647
        %v360 = vand.u32 %v359, 65535
        %v361 = vshra.s32 %v359, 16
        %v362 = vcvt.s32.f32 %v360
        %v363 = vcvt.s32.f32 %v361
        %364 = vmin.xlane.f32.xlu0 %v363
        %v365 = vpop.xlane.xlu0 %364
        %vm366 = vcmp.eq.f32.partialorder %v363, %v365
        %v367 = vsel %vm366, %v362, inf
        %368 = vmin.xlane.f32.xlu0 %v367
        %v369 = vpop.xlane.xlu0 %368
        %v370 = vcvt.f32.s32 %v369
        %v371 = vcvt.f32.s32 %v365
        %v372 = vshll.u32 %v371, 16
        %v373 = vadd.s32 %v372, %v370
        %v374 = vand.u32 %v358, 7
        %v375 = vand.u32 %v373, 7
        %v376 = vand.u32 %v358, 4294967288
        %v377 = vand.u32 %v373, 4294967288
        %v380 = vadd.f32 %v376, 1e-08
        %v381 = vadd.f32 %v377, 1e-08
        %v382 = vrcp.pop %v380
        %v383 = vrcp.pop %v381
        %vm384 = vcmp.eq.s32.totalorder %v286, %v374
        %vm385 = vcmp.eq.s32.totalorder %v286, %v375
        %v386 = vsel %vm384, %v382, 0.0
        %v387 = vsel %vm385, %v383, 0.0
        %v388 = vadd.f32 %v338, %v386
        %v389 = vadd.f32 %v339, %v387
        %v390 = vadd.f32 %v340, %v382
        %v391 = vadd.f32 %v341, %v383
        %v392 = vsel %vm384, 2147483647, %v342
        %v393 = vsel %vm385, 2147483647, %v343
        %v394 = vsel %vm293, %v392, 2147483647
        %v395 = vand.u32 %v394, 65535
        %v396 = vshra.s32 %v394, 16
        %v397 = vcvt.s32.f32 %v395
        %v398 = vcvt.s32.f32 %v396
        %399 = vmin.xlane.f32.xlu0 %v398
        %v400 = vpop.xlane.xlu0 %399
        %vm401 = vcmp.eq.f32.partialorder %v398, %v400
        %v402 = vsel %vm401, %v397, inf
        %403 = vmin.xlane.f32.xlu0 %v402
        %v404 = vpop.xlane.xlu0 %403
        %v405 = vcvt.f32.s32 %v404
        %v406 = vcvt.f32.s32 %v400
        %v407 = vshll.u32 %v406, 16
        %v408 = vadd.s32 %v407, %v405
        %v409 = vsel %vm293, %v393, 2147483647
        %v410 = vand.u32 %v409, 65535
        %v411 = vshra.s32 %v409, 16
        %v412 = vcvt.s32.f32 %v410
        %v413 = vcvt.s32.f32 %v411
        %414 = vmin.xlane.f32.xlu0 %v413
        %v415 = vpop.xlane.xlu0 %414
        %vm416 = vcmp.eq.f32.partialorder %v413, %v415
        %v417 = vsel %vm416, %v412, inf
        %418 = vmin.xlane.f32.xlu0 %v417
        %v419 = vpop.xlane.xlu0 %418
        %v420 = vcvt.f32.s32 %v419
        %v421 = vcvt.f32.s32 %v415
        %v422 = vshll.u32 %v421, 16
        %v423 = vadd.s32 %v422, %v420
        %v424 = vand.u32 %v408, 7
        %v425 = vand.u32 %v423, 7
        %v426 = vand.u32 %v408, 4294967288
        %v427 = vand.u32 %v423, 4294967288
        %v430 = vadd.f32 %v426, 1e-08
        %v431 = vadd.f32 %v427, 1e-08
        %v432 = vrcp.pop %v430
        %v433 = vrcp.pop %v431
        %vm434 = vcmp.eq.s32.totalorder %v286, %v424
        %vm435 = vcmp.eq.s32.totalorder %v286, %v425
        %v436 = vsel %vm434, %v432, 0.0
        %v437 = vsel %vm435, %v433, 0.0
        %v438 = vadd.f32 %v388, %v436
        %v439 = vadd.f32 %v389, %v437
        %v440 = vadd.f32 %v390, %v432
        %v441 = vadd.f32 %v391, %v433
        %v442 = vrcp.pop %v440
        %v443 = vrcp.pop %v441
        %v444 = vmul.f32 %v438, %v442
        %v445 = vmul.f32 %v439, %v443
        %v446 = vpack.c.bf16 %v445, %v444
        %v447 = vld [vmem:[%s232] sm:$0xf]
        %v449 = vsel %vm293, %v446, 0
        %vm451 = vcmask 1043456
        %v453 = vsel %vm451, %v447, 0
        %455 = vmatpush.bf16.msra.mxu0 0
        %456 = vmatpush.bf16.msra.mxu0 0
        %457 = vmatpush.bf16.msra.mxu0 0
        %458 = vmatpush.bf16.msra.mxu0 0
        %459 = vmatpush.bf16.msra.mxu0 0
        %460 = vmatpush.bf16.msra.mxu0 0
        %461 = vmatpush.bf16.msra.mxu0 0
        %462 = vmatpush.bf16.msra.mxu0 %v453
        %463 = vmatmul.bf16.gmra.mxu0 %v449
        %v464 = vpop.f32.mrf.mxu0
        %v465 = vadd.f32 0.0, %v464
        %v466 = vpop.f32.mrf.mxu0
        %v467 = vadd.f32 0.0, %v466
        %468 = vdwg.mxu0
        %v469 = vpack.c.bf16 %v465, %v465
        %v470 = vpack.c.bf16 %v467, %v467
        %471 = vst [vmem:[%s214] sm:$0xf] %v469
        %472 = vst [vmem:[%s214 + $0x4] sm:$0xf] %v470
        %s473 = sand.u32 %s119, 1
        %s474 = scalar_lea.sflag [#allocation3], %s473
        %s475 = sand.u32 %s119, 1
        %s476 = smul.addr %s475, 8
        %s477 = scalar_lea.vmem [#allocation2], %s476
        // Predicated region
        $region33: #{tpu_custom_call.1} parent=31 // pred_check
          %p478 = pneg %p129
        $region34: #{tpu_custom_call.1} parent=31 // pred_check_branch
          %480 = sbr.rel (%p478) target = $region36
        $region35: #{tpu_custom_call.1} parent=31 // pred_region
          %s481 = smul.u32 2, %s22
          %483 = vsyncadd %s474, 0
          %s484 = smul.addr %s21, 2
          %s485 = sadd.s32 %s481, %s484
          %s486 = smul.addr %s485, 4
          %s487 = scalar_lea.hbm %s3, %s486
          %s488 = sshll.u32 %s477, 4
          %s489 = int_to_ptr.vmem [resolvable:$true] %s488
          %s490 = sshll.u32 %s487, 4
          %s491 = int_to_ptr.hbm [resolvable:$true] %s490
          %496 = dma.vmem_to_hbm [thread:$0]  %s489, 128, %s491, %s474, 64, 64, 4
        $region36: #{tpu_custom_call.1} parent=31 // pred_fallthru
          _
      $region32: #{tpu_custom_call.1} parent=5 // pred_fallthru
        _
      %p497 = scmp.le.s32.totalorder 2, %s12
      // Predicated region
      $region37: #{tpu_custom_call.1} parent=5 // pred_check
        %p498 = pneg %p497
      $region38: #{tpu_custom_call.1} parent=5 // pred_check_branch
        %500 = sbr.rel (%p498) target = $region40
      $region39: #{tpu_custom_call.1} parent=5 // pred_region
        %s501 = ssub.s32 %s12, 2
        // Predicated region
        $region41: #{tpu_custom_call.1} parent=39 // pred_check
          %p502 = pneg %p135
        $region42: #{tpu_custom_call.1} parent=39 // pred_check_branch
          %504 = sbr.rel (%p502) target = $region44
        $region43: #{tpu_custom_call.1} parent=39 // pred_region
          %s505 = sand.u32 %s120, 1
          %s506 = scalar_lea.sflag [#allocation3], %s505
          %s507 = sand.u32 %s120, 1
          %s508 = smul.addr %s507, 8
          %s509 = scalar_lea.vmem [#allocation2], %s508
          %511 = dma.done %s506, 128
        $region44: #{tpu_custom_call.1} parent=39 // pred_fallthru
          _
      $region40: #{tpu_custom_call.1} parent=5 // pred_fallthru
        _
    $region6: #{tpu_custom_call.1} parent=1 // loop_footer
      %s16 = sadd.s32 1, %s12
    $region7: #{tpu_custom_call.1} parent=1 // loop_footer_branch
      %11 = sbr.rel target = $region3
    $region8: #{tpu_custom_call.1} parent=1 // loop_exit
      _
    %512 = vsyncpa [#allocation3], 1
    %s513 = scalar_lea.sflag [#allocation3], 1
    %514 = vsyncpa %s513, 1

</llo_original>
